<compile_context>
chip_gen: v7x
topology: tpu7x:2x2x1
jax: 0.10.0
libtpu: 0.0.40
codegen_flags: <defaults>
</compile_context>

<pallas_src>
import functools

import jax
import jax.numpy as jnp
from jax.experimental import pallas as pl
from jax.experimental.pallas import tpu as pltpu

NEG_SLOPE = 0.01  # torch.nn.LeakyReLU default


def _round_up(n, m):
    return ((n + m - 1) // m) * m


def _leaky_relu(x):
    return jnp.where(x > 0, x, NEG_SLOPE * x)


def successor_mlp_kernel(x_ref, w_ref, b_ref, o_ref, *, s_in):
    """One batch tile of the fused 3-layer MLP.

    x_ref: (TB, S) f32      streamed per grid step
    w_ref: (3, D, D) bf16    VMEM-resident packed weights (zero padded)
    b_ref: (3, 1, D) f32     VMEM-resident packed biases  (zero padded)
    o_ref: (TB, S) f32      narrow (un-padded) output tile
    """
    x = x_ref[...].astype(jnp.bfloat16)                      # (TB, S)

    # Layer 1: contract only against the live rows of W1 (rest is zero pad).
    w1 = w_ref[0, :s_in, :]                                   # (S, D)
    h = jnp.dot(x, w1, preferred_element_type=jnp.float32) + b_ref[0]
    h = _leaky_relu(h)

    # Layer 2
    h = jnp.dot(h.astype(jnp.bfloat16), w_ref[1],
                preferred_element_type=jnp.float32) + b_ref[1]
    h = _leaky_relu(h)

    # Layer 3
    out = jnp.dot(h.astype(jnp.bfloat16), w_ref[2],
                  preferred_element_type=jnp.float32) + b_ref[2]

    s_out = o_ref.shape[-1]
    o_ref[...] = out[:, :s_out].astype(o_ref.dtype)


def successor_representation(x, w_stack, b_stack):
    """x: (B, S) float32.  w_stack: (3, D, D) bf16, b_stack: (3, 1, D) f32."""
    B, S = x.shape
    D = w_stack.shape[-1]

    # Batch tile: large enough to amortize per-grid-step overhead, capped so
    # the grid has >= 2 steps (feeds both TensorCores on v7x) whenever B > 8.
    TB = min(512, max(8, _round_up(-(-B // 2), 8)))
    B_pad = _round_up(B, TB)
    x_pad = x if B_pad == B else jnp.pad(x, ((0, B_pad - B), (0, 0)))

    kernel = functools.partial(successor_mlp_kernel, s_in=S)

    grid_spec = pltpu.PrefetchScalarGridSpec(
        num_scalar_prefetch=0,
        grid=(B_pad // TB,),
        in_specs=[
            # streaming input tile (un-padded feature dim); double-buffered
            pl.BlockSpec((TB, S), lambda i: (i, 0)),
            # packed weights / biases: constant block index -> fetched once,
            # VMEM-resident for the whole grid
            pl.BlockSpec((3, D, D), lambda i: (0, 0, 0)),
            pl.BlockSpec((3, 1, D), lambda i: (0, 0, 0)),
        ],
        out_specs=pl.BlockSpec((TB, S), lambda i: (i, 0)),
    )

    out = pl.pallas_call(
        kernel,
        out_shape=jax.ShapeDtypeStruct((B_pad, S), x.dtype),
        grid_spec=grid_spec,
        compiler_params=pltpu.CompilerParams(
            dimension_semantics=("parallel",),  # shard batch tiles across TCs
        ),
    )(x_pad, w_stack, b_stack)

    return out[:B]


def init_params(key, num_abstract_states):
    """Deterministic init mimicking nn.Linear (uniform(-1/sqrt(fan_in), +))."""
    dims = [(num_abstract_states, 64), (64, 128), (128, num_abstract_states)]
    params = {}
    for i, (fan_in, fan_out) in enumerate(dims, start=1):
        key, kw, kb = jax.random.split(key, 3)
        bound = 1.0 / jnp.sqrt(jnp.float32(fan_in))
        params[f"w{i}"] = jax.random.uniform(kw, (fan_in, fan_out), jnp.float32,
                                             minval=-bound, maxval=bound)
        params[f"b{i}"] = jax.random.uniform(kb, (1, fan_out), jnp.float32,
                                             minval=-bound, maxval=bound)
    return params


def pack_params(params, num_abstract_states):
    """Pad every layer to (D, D)/(1, D) with zeros and stack.

    Weights -> bf16 (MXU operands); biases stay f32 (added post-accumulation).
    """
    S = num_abstract_states
    D = max(128, _round_up(S, 128))

    def pad_w(w):
        r, c = w.shape
        return jnp.pad(w, ((0, D - r), (0, D - c))).astype(jnp.bfloat16)

    def pad_b(b):
        return jnp.pad(b, ((0, 0), (0, D - b.shape[1]))).astype(jnp.float32)

    w_stack = jnp.stack([pad_w(params["w1"]), pad_w(params["w2"]), pad_w(params["w3"])])
    b_stack = jnp.stack([pad_b(params["b1"]), pad_b(params["b2"]), pad_b(params["b3"])])
    return w_stack, b_stack


def reference_forward(x, params):
    h = x @ params["w1"] + params["b1"]
    h = jnp.where(h > 0, h, NEG_SLOPE * h)
    h = h @ params["w2"] + params["b2"]
    h = jnp.where(h > 0, h, NEG_SLOPE * h)
    return h @ params["w3"] + params["b3"]


if __name__ == "__main__":
    num_abstract_states = 16
    batch = 200                      # exercises 2 grid steps + batch-row padding

    key = jax.random.PRNGKey(0)
    key, kx = jax.random.split(key)
    x = jax.random.normal(kx, (batch, num_abstract_states), jnp.float32)
    params = init_params(key, num_abstract_states)
    w_stack, b_stack = pack_params(params, num_abstract_states)

    fwd = jax.jit(successor_representation)
    out = jax.block_until_ready(fwd(x, w_stack, b_stack))

    ref = reference_forward(x, params)
    assert out.shape == (batch, num_abstract_states)
    # bf16 MXU operands with f32 accumulation -> relaxed tolerance vs f32 ref.
    assert jnp.allclose(out, ref, atol=2e-2, rtol=2e-2), "mismatch vs reference"

    print("KERNEL_OK")
</pallas_src>

<mosaic_0001>
module attributes {stable_mosaic.version = 11 : i64} {
  func.func @successor_mlp_kernel(%arg0: i32, %arg1: memref<104x16xf32, #tpu.memory_space<vmem>>, %arg2: memref<3x128x128xbf16, #tpu.memory_space<vmem>>, %arg3: memref<3x1x128xf32, #tpu.memory_space<vmem>>, %arg4: memref<104x16xf32, #tpu.memory_space<vmem>>) attributes {dimension_semantics = [#tpu.dimension_semantics<parallel>], iteration_bounds = array<i64: 2>, scalar_prefetch = 0 : i64, scratch_operands = 0 : i64, tpu.core_type = #tpu.core_type<tc>, window_params = [{transform_indices = @transform_0, window_bounds = array<i64: 104, 16>}, {pipeline_mode = #tpu.pipeline_mode<synchronous>, transform_indices = @transform_1, window_bounds = array<i64: 3, 128, 128>}, {pipeline_mode = #tpu.pipeline_mode<synchronous>, transform_indices = @transform_2, window_bounds = array<i64: 3, 1, 128>}, {transform_indices = @transform_3, window_bounds = array<i64: 104, 16>}]} {
    %c0 = arith.constant 0 : index
    %c0_0 = arith.constant 0 : index
    %0 = vector.load %arg1[%c0, %c0_0] : memref<104x16xf32, #tpu.memory_space<vmem>>, vector<104x16xf32>
    %1 = arith.truncf %0 : vector<104x16xf32> to vector<104x16xbf16>
    %c0_1 = arith.constant 0 : index
    %c0_2 = arith.constant 0 : index
    %c0_3 = arith.constant 0 : index
    %2 = vector.load %arg2[%c0_1, %c0_2, %c0_3] : memref<3x128x128xbf16, #tpu.memory_space<vmem>>, vector<1x16x128xbf16>
    %3 = vector.shape_cast %2 : vector<1x16x128xbf16> to vector<16x128xbf16>
    %cst = arith.constant dense<0.000000e+00> : vector<104x128xf32>
    %4 = tpu.matmul %1, %3, %cst {dimension_numbers = #tpu.dot_dimension_numbers<[1], [0], [0], [1], [0, 0, 1, 1], [], []>} : vector<104x16xbf16>, vector<16x128xbf16>, vector<104x128xf32> -> vector<104x128xf32>
    %c0_4 = arith.constant 0 : index
    %c0_5 = arith.constant 0 : index
    %c0_6 = arith.constant 0 : index
    %5 = vector.load %arg3[%c0_4, %c0_5, %c0_6] : memref<3x1x128xf32, #tpu.memory_space<vmem>>, vector<1x1x128xf32>
    %6 = vector.shape_cast %5 : vector<1x1x128xf32> to vector<1x128xf32>
    %7 = vector.broadcast %6 : vector<1x128xf32> to vector<104x128xf32>
    %8 = arith.addf %4, %7 : vector<104x128xf32>
    %cst_7 = arith.constant 0.000000e+00 : f32
    %9 = vector.broadcast %cst_7 : f32 to vector<104x128xf32>
    %10 = arith.cmpf ogt, %8, %9 : vector<104x128xf32>
    %cst_8 = arith.constant 0.00999999977 : f32
    %11 = vector.broadcast %cst_8 : f32 to vector<104x128xf32>
    %12 = arith.mulf %11, %8 : vector<104x128xf32>
    %13 = arith.select %10, %8, %12 : vector<104x128xi1>, vector<104x128xf32>
    %14 = arith.truncf %13 : vector<104x128xf32> to vector<104x128xbf16>
    %c1 = arith.constant 1 : index
    %c0_9 = arith.constant 0 : index
    %c0_10 = arith.constant 0 : index
    %15 = vector.load %arg2[%c1, %c0_9, %c0_10] : memref<3x128x128xbf16, #tpu.memory_space<vmem>>, vector<1x128x128xbf16>
    %16 = vector.shape_cast %15 : vector<1x128x128xbf16> to vector<128x128xbf16>
    %cst_11 = arith.constant dense<0.000000e+00> : vector<104x128xf32>
    %17 = tpu.matmul %14, %16, %cst_11 {dimension_numbers = #tpu.dot_dimension_numbers<[1], [0], [0], [1], [0, 0, 1, 1], [], []>} : vector<104x128xbf16>, vector<128x128xbf16>, vector<104x128xf32> -> vector<104x128xf32>
    %c1_12 = arith.constant 1 : index
    %c0_13 = arith.constant 0 : index
    %c0_14 = arith.constant 0 : index
    %18 = vector.load %arg3[%c1_12, %c0_13, %c0_14] : memref<3x1x128xf32, #tpu.memory_space<vmem>>, vector<1x1x128xf32>
    %19 = vector.shape_cast %18 : vector<1x1x128xf32> to vector<1x128xf32>
    %20 = vector.broadcast %19 : vector<1x128xf32> to vector<104x128xf32>
    %21 = arith.addf %17, %20 : vector<104x128xf32>
    %cst_15 = arith.constant 0.000000e+00 : f32
    %22 = vector.broadcast %cst_15 : f32 to vector<104x128xf32>
    %23 = arith.cmpf ogt, %21, %22 : vector<104x128xf32>
    %cst_16 = arith.constant 0.00999999977 : f32
    %24 = vector.broadcast %cst_16 : f32 to vector<104x128xf32>
    %25 = arith.mulf %24, %21 : vector<104x128xf32>
    %26 = arith.select %23, %21, %25 : vector<104x128xi1>, vector<104x128xf32>
    %27 = arith.truncf %26 : vector<104x128xf32> to vector<104x128xbf16>
    %c2 = arith.constant 2 : index
    %c0_17 = arith.constant 0 : index
    %c0_18 = arith.constant 0 : index
    %28 = vector.load %arg2[%c2, %c0_17, %c0_18] : memref<3x128x128xbf16, #tpu.memory_space<vmem>>, vector<1x128x128xbf16>
    %29 = vector.shape_cast %28 : vector<1x128x128xbf16> to vector<128x128xbf16>
    %cst_19 = arith.constant dense<0.000000e+00> : vector<104x128xf32>
    %30 = tpu.matmul %27, %29, %cst_19 {dimension_numbers = #tpu.dot_dimension_numbers<[1], [0], [0], [1], [0, 0, 1, 1], [], []>} : vector<104x128xbf16>, vector<128x128xbf16>, vector<104x128xf32> -> vector<104x128xf32>
    %c2_20 = arith.constant 2 : index
    %c0_21 = arith.constant 0 : index
    %c0_22 = arith.constant 0 : index
    %31 = vector.load %arg3[%c2_20, %c0_21, %c0_22] : memref<3x1x128xf32, #tpu.memory_space<vmem>>, vector<1x1x128xf32>
    %32 = vector.shape_cast %31 : vector<1x1x128xf32> to vector<1x128xf32>
    %33 = vector.broadcast %32 : vector<1x128xf32> to vector<104x128xf32>
    %34 = arith.addf %30, %33 : vector<104x128xf32>
    %35 = vector.extract_strided_slice %34 {offsets = [0, 0], sizes = [104, 16], strides = [1, 1]} : vector<104x128xf32> to vector<104x16xf32>
    %c0_23 = arith.constant 0 : index
    %c0_24 = arith.constant 0 : index
    %36 = vector.load %arg4[%c0_23, %c0_24] : memref<104x16xf32, #tpu.memory_space<vmem>>, vector<104x16xf32>
    tpu.vector_store %arg4[%c0_23, %c0_24], %35 {strides = array<i32>} : memref<104x16xf32, #tpu.memory_space<vmem>>, vector<104x16xf32>,
    return
  }
  func.func @transform_0(%arg0: i32) -> (i32, i32) {
    %c0_i32 = arith.constant 0 : i32
    %c0_i32_0 = arith.constant 0 : i32
    return %arg0, %c0_i32 : i32, i32
  }
  func.func @transform_1(%arg0: i32) -> (i32, i32, i32) {
    %c0_i32 = arith.constant 0 : i32
    %c0_i32_0 = arith.constant 0 : i32
    %c0_i32_1 = arith.constant 0 : i32
    %c0_i32_2 = arith.constant 0 : i32
    return %c0_i32, %c0_i32_0, %c0_i32_1 : i32, i32, i32
  }
  func.func @transform_2(%arg0: i32) -> (i32, i32, i32) {
    %c0_i32 = arith.constant 0 : i32
    %c0_i32_0 = arith.constant 0 : i32
    %c0_i32_1 = arith.constant 0 : i32
    %c0_i32_2 = arith.constant 0 : i32
    return %c0_i32, %c0_i32_0, %c0_i32_1 : i32, i32, i32
  }
  func.func @transform_3(%arg0: i32) -> (i32, i32) {
    %c0_i32 = arith.constant 0 : i32
    %c0_i32_0 = arith.constant 0 : i32
    return %arg0, %c0_i32 : i32, i32
  }
}

</mosaic_0001>

<llo_original>
// kernel: successor_representation.1
$region0: #{successor_representation.1}
  #allocation0 [shape = 'u32[]', space=smem, size = 0x4, offset = 0x4, fixed_abs, tag = 'smem constant byte address 0x4 - core index']
  #allocation1 [shape = 'u32[144,128]{1,0:T(1,128)}', space=vmem, size = 0x12000, scoped, tag = 'internal scratch']
  %s0 = inlined_call_operand.vmem [shape: f32[208,16], index: 0, kind: input, shape index: {}]
  %s1 = inlined_call_operand.vmem [shape: bf16[3,128,128], index: 1, kind: input, shape index: {}]
  %s2 = inlined_call_operand.vmem [shape: f32[3,1,128], index: 2, kind: input, shape index: {}]
  %s3 = inlined_call_operand.vmem [shape: f32[208,16], index: 3, kind: output, shape index: {}]
  %s4 = sld [smem:[#allocation0]]
  $region45: #{successor_representation.1} parent=0
    _
  %s6 = ssub.s32 1, %s4
  %s7 = scalar_select 0, %s6, %s4
  loop: start=0, step=1, limit=4
  $region2: #{successor_representation.1} parent=0 // loop_pre_header
    _
  $region3: #{successor_representation.1} parent=0 // loop_header
    %s9 = sphi 0, %s13
    %p10 = scmp.ge.s32.totalorder %s9, 4
    %s19 = sphi 0, %s21
    %s22 = sphi 0, %s19
    %s23 = sphi 0, %s22
    %s39 = sphi 0, %s23
    %s43 = sphi 0, %s43
    %s45 = sphi 0, %s43
    %s46 = sphi 0, %s45
    %s60 = sphi 0, %s46
    %s64 = sphi 0, %s64
    %s66 = sphi 0, %s64
    %s67 = sphi 0, %s66
    %s81 = sphi 0, %s67
    %s87 = sphi 0, %s89
    %s90 = sphi 0, %s87
    %s91 = sphi 0, %s90
    %s107 = sphi 0, %s91
  $region4: #{successor_representation.1} parent=0 // loop_header_branch
    %12 = sbr.rel (%p10) target = $region8
  $region5: #{successor_representation.1} parent=0 // loop_body
    %s14 = ssub.s32 %s9, 1
    %s15 = ssub.s32 %s9, 2
    %s16 = sadd.s32 %s9, 1
    %s17 = ssub.s32 %s9, %s16
    %p18 = scmp.eq.s32.totalorder %s17, 0
    %s20 = sadd.s32 %s19, 1
    %s21 = scalar_select %p18, %s19, %s20
    %p24 = pneg %p18
    %p25 = scmp.eq.s32.totalorder %s9, 1
    %p26 = por %p24, %p25
    %p27 = scmp.ne.s32.totalorder %s19, %s22
    %p28 = scmp.eq.s32.totalorder %s9, 0
    %p29 = por %p27, %p28
    %p30 = scmp.ne.s32.totalorder %s19, %s22
    %p31 = scmp.eq.s32.totalorder %s14, 1
    %p32 = por %p30, %p31
    %p33 = scmp.ne.s32.totalorder %s22, %s23
    %p34 = scmp.eq.s32.totalorder %s14, 0
    %p35 = por %p33, %p34
    %p36 = scmp.ne.s32.totalorder %s22, %s23
    %p37 = scmp.eq.s32.totalorder %s15, 1
    %p38 = por %p36, %p37
    %p40 = scmp.ne.s32.totalorder %s23, %s39
    %p41 = scmp.eq.s32.totalorder %s15, 0
    %p42 = por %p40, %p41
    %s44 = sadd.s32 %s43, 1
    %p47 = scmp.eq.s32.totalorder %s9, 1
    %p48 = scmp.ne.s32.totalorder %s43, %s45
    %p49 = scmp.eq.s32.totalorder %s9, 0
    %p50 = por %p48, %p49
    %p51 = scmp.ne.s32.totalorder %s43, %s45
    %p52 = scmp.eq.s32.totalorder %s14, 1
    %p53 = por %p51, %p52
    %p54 = scmp.ne.s32.totalorder %s45, %s46
    %p55 = scmp.eq.s32.totalorder %s14, 0
    %p56 = por %p54, %p55
    %p57 = scmp.ne.s32.totalorder %s45, %s46
    %p58 = scmp.eq.s32.totalorder %s15, 1
    %p59 = por %p57, %p58
    %p61 = scmp.ne.s32.totalorder %s46, %s60
    %p62 = scmp.eq.s32.totalorder %s15, 0
    %p63 = por %p61, %p62
    %s65 = sadd.s32 %s64, 1
    %p68 = scmp.eq.s32.totalorder %s9, 1
    %p69 = scmp.ne.s32.totalorder %s64, %s66
    %p70 = scmp.eq.s32.totalorder %s9, 0
    %p71 = por %p69, %p70
    %p72 = scmp.ne.s32.totalorder %s64, %s66
    %p73 = scmp.eq.s32.totalorder %s14, 1
    %p74 = por %p72, %p73
    %p75 = scmp.ne.s32.totalorder %s66, %s67
    %p76 = scmp.eq.s32.totalorder %s14, 0
    %p77 = por %p75, %p76
    %p78 = scmp.ne.s32.totalorder %s66, %s67
    %p79 = scmp.eq.s32.totalorder %s15, 1
    %p80 = por %p78, %p79
    %p82 = scmp.ne.s32.totalorder %s67, %s81
    %p83 = scmp.eq.s32.totalorder %s15, 0
    %p84 = por %p82, %p83
    %s85 = ssub.s32 %s9, %s16
    %p86 = scmp.eq.s32.totalorder %s85, 0
    %s88 = sadd.s32 %s87, 1
    %s89 = scalar_select %p86, %s87, %s88
    %p92 = pneg %p86
    %p93 = scmp.eq.s32.totalorder %s9, 1
    %p94 = por %p92, %p93
    %p95 = scmp.ne.s32.totalorder %s87, %s90
    %p96 = scmp.eq.s32.totalorder %s9, 0
    %p97 = por %p95, %p96
    %p98 = scmp.ne.s32.totalorder %s87, %s90
    %p99 = scmp.eq.s32.totalorder %s14, 1
    %p100 = por %p98, %p99
    %p101 = scmp.ne.s32.totalorder %s90, %s91
    %p102 = scmp.eq.s32.totalorder %s14, 0
    %p103 = por %p101, %p102
    %p104 = scmp.ne.s32.totalorder %s90, %s91
    %p105 = scmp.eq.s32.totalorder %s15, 1
    %p106 = por %p104, %p105
    %p108 = scmp.ne.s32.totalorder %s91, %s107
    %p109 = scmp.eq.s32.totalorder %s15, 0
    %p110 = por %p108, %p109
    %p111 = scmp.le.s32.totalorder 1, %s9
    %p112 = scmp.lt.s32.totalorder %s9, 3
    %p113 = pnand %p111, %p112
    %p114 = pneg %p113
    // Predicated region
    $region9: #{successor_representation.1} parent=5 // pred_check
      _
    $region10: #{successor_representation.1} parent=5 // pred_check_branch
      %116 = sbr.rel (%p113) target = $region12
    $region11: #{successor_representation.1} parent=5 // pred_region
      %s117 = ssub.s32 %s9, 1
      // Predicated region
      $region13: #{successor_representation.1} parent=11 // pred_check
        %p118 = pneg %p56
      $region14: #{successor_representation.1} parent=11 // pred_check_branch
        %120 = sbr.rel (%p118) target = $region16
      $region15: #{successor_representation.1} parent=11 // pred_region
        _
      $region16: #{successor_representation.1} parent=11 // pred_fallthru
        _
      // Predicated region
      $region17: #{successor_representation.1} parent=11 // pred_check
        %p121 = pneg %p77
      $region18: #{successor_representation.1} parent=11 // pred_check_branch
        %123 = sbr.rel (%p121) target = $region20
      $region19: #{successor_representation.1} parent=11 // pred_region
        _
      $region20: #{successor_representation.1} parent=11 // pred_fallthru
        _
    $region12: #{successor_representation.1} parent=5 // pred_fallthru
      _
    %p124 = scmp.lt.s32.totalorder %s9, 2
    // Predicated region
    $region21: #{successor_representation.1} parent=5 // pred_check
      %p125 = pneg %p124
    $region22: #{successor_representation.1} parent=5 // pred_check_branch
      %127 = sbr.rel (%p125) target = $region24
    $region23: #{successor_representation.1} parent=5 // pred_region
      // Predicated region
      $region25: #{successor_representation.1} parent=23 // pred_check
        %p128 = pneg %p29
      $region26: #{successor_representation.1} parent=23 // pred_check_branch
        %130 = sbr.rel (%p128) target = $region28
      $region27: #{successor_representation.1} parent=23 // pred_region
        %s131 = smul.u32 13, %s9
        %p132 = scmp.lt.s32.totalorder %s131, 25
        %s133 = scalar_select %p132, %s131, 25
        %s134 = smul.addr %s133, 8
        %s135 = scalar_lea.vmem %s0, %s134
        %s136 = smul.u32 13, %s9
      $region28: #{successor_representation.1} parent=23 // pred_fallthru
        _
    $region24: #{successor_representation.1} parent=5 // pred_fallthru
      _
    %p137 = scmp.le.s32.totalorder 1, %s9
    %p138 = scmp.lt.s32.totalorder %s9, 3
    %p139 = pnand %p137, %p138
    %p140 = pneg %p139
    // Predicated region
    $region29: #{successor_representation.1} parent=5 // pred_check
      _
    $region30: #{successor_representation.1} parent=5 // pred_check_branch
      %142 = sbr.rel (%p139) target = $region32
    $region31: #{successor_representation.1} parent=5 // pred_region
      %s143 = ssub.s32 %s9, 1
      %s144 = smul.u32 13, %s14
      %p145 = scmp.lt.s32.totalorder %s144, 25
      %s146 = scalar_select %p145, %s144, 25
      %s147 = smul.addr %s146, 8
      %s148 = scalar_lea.vmem %s0, %s147
      %p149 = pneg %p35
      %p150 = pneg %p32
      %p151 = pneg %p56
      %p152 = pneg %p53
      %p153 = pneg %p77
      %p154 = pneg %p74
      %p155 = pneg %p103
      %p156 = pneg %p100
      %s157 = smul.u32 13, %s14
      %p158 = scmp.lt.s32.totalorder %s157, 25
      %s159 = scalar_select %p158, %s157, 25
      %s160 = smul.addr %s159, 8
      %s161 = scalar_lea.vmem %s3, %s160
      %s162 = smul.u32 13, %s14
      %p163 = scmp.lt.s32.totalorder %s162, 25
      %s164 = scalar_select %p163, %s162, 25
      %s165 = smul.addr %s164, 8
      %s166 = scalar_lea.vmem %s0, %s165
      %s167 = smul.u32 13, %s14
      %s168 = smul.u32 13, %s14
      %p169 = scmp.lt.s32.totalorder %s168, 25
      %s170 = scalar_select %p169, %s168, 25
      %s171 = smul.addr %s170, 8
      %s172 = scalar_lea.vmem %s3, %s171
      %s173 = smul.u32 13, %s14
      %v175 = vld [vmem:[%s166] sm:$0xff]
      %v176 = vld [vmem:[%s166 + $0x8] sm:$0xff]
      %v177 = vld [vmem:[%s166 + $0x10] sm:$0xff]
      %v178 = vld [vmem:[%s166 + $0x18] sm:$0xff]
      %v179 = vld [vmem:[%s166 + $0x20] sm:$0xff]
      %v180 = vld [vmem:[%s166 + $0x28] sm:$0xff]
      %v181 = vld [vmem:[%s166 + $0x30] sm:$0xff]
      %v182 = vld [vmem:[%s166 + $0x38] sm:$0xff]
      %v183 = vld [vmem:[%s166 + $0x40] sm:$0xff]
      %v184 = vld [vmem:[%s166 + $0x48] sm:$0xff]
      %v185 = vld [vmem:[%s166 + $0x50] sm:$0xff]
      %v186 = vld [vmem:[%s166 + $0x58] sm:$0xff]
      %v187 = vld [vmem:[%s166 + $0x60] sm:$0xff]
      %v188 = vpack.c.bf16 %v176, %v175
      %v189 = vpack.c.bf16 %v178, %v177
      %v190 = vpack.c.bf16 %v180, %v179
      %v191 = vpack.c.bf16 %v182, %v181
      %v192 = vpack.c.bf16 %v184, %v183
      %v193 = vpack.c.bf16 %v186, %v185
      %v194 = vpack.c.bf16 %v187, %v187
      %v195 = vld [vmem:[%s1] sm:$0xf]
      %v196 = vld [vmem:[%s1 + $0x4] sm:$0xf]
      %v197 = vld [vmem:[%s2] sm:$0x1]
      %v199 = vlaneseq
      %v200 = vshrl.u32 %v199, 7
      %v201 = vsub.s32 0, %v200
      %v202 = vrot.slane %v197, %v201
      %v206 = vunpack.c.l.b16 %v195
      %v207 = vunpack.c.l.b16 %v196
      %v208 = vpack.c.b16 %v207, %v206
      %vm210 = vcmask 130048
      %v212 = vsel %vm210, %v188, 0
      %v215 = vsel %vm210, %v189, 0
      %v218 = vsel %vm210, %v190, 0
      %v221 = vsel %vm210, %v191, 0
      %v224 = vsel %vm210, %v192, 0
      %v227 = vsel %vm210, %v193, 0
      %v230 = vsel %vm210, %v194, 0
      %232 = vmatprep.subr.bf16.mxu0 0
      %233 = vmatpush1.bf16.msra.mxu0 %v208
      %234 = vmatprep.subr.bf16.mxu0 0
      %235 = vmatpush1.bf16.msra.mxu0 0
      %236 = vmatprep.subr.bf16.mxu0 0
      %237 = vmatpush1.bf16.msra.mxu0 0
      %238 = vmatprep.subr.bf16.mxu0 0
      %239 = vmatpush1.bf16.msra.mxu0 0
      %240 = vmatprep.subr.bf16.mxu0 0
      %241 = vmatpush1.bf16.msra.mxu0 0
      %242 = vmatprep.subr.bf16.mxu0 0
      %243 = vmatpush1.bf16.msra.mxu0 0
      %244 = vmatprep.subr.bf16.mxu0 0
      %245 = vmatpush1.bf16.msra.mxu0 0
      %246 = vmatprep.subr.bf16.mxu0 0
      %247 = vmatpush1.bf16.msra.mxu0 0
      %248 = vmatprep.subr.bf16.mxu0 0
      %249 = vmatpush1.bf16.msra.mxu0 0
      %250 = vmatprep.subr.bf16.mxu0 0
      %251 = vmatpush1.bf16.msra.mxu0 0
      %252 = vmatprep.subr.bf16.mxu0 0
      %253 = vmatpush1.bf16.msra.mxu0 0
      %254 = vmatprep.subr.bf16.mxu0 0
      %255 = vmatpush1.bf16.msra.mxu0 0
      %256 = vmatprep.subr.bf16.mxu0 0
      %257 = vmatpush1.bf16.msra.mxu0 0
      %258 = vmatprep.subr.bf16.mxu0 0
      %259 = vmatpush1.bf16.msra.mxu0 0
      %260 = vmatprep.subr.bf16.mxu0 0
      %261 = vmatpush1.bf16.msra.mxu0 0
      %262 = vmatprep.subr.bf16.mxu0 0
      %263 = vmatpush1.bf16.msra.mxu0 0
      %264 = vmatprep.mubr.bf16.mxu0 0
      %265 = vmatmul.mubr.bf16.gmra.mrb[0].mxu0 %v212
      %v266 = vpop.f32.mrb[0].mxu0
      %v267 = vadd.f32 %v202, %v266
      %v268 = vpop.f32.mrb[0].mxu0
      %v269 = vpop.f32.mrb[0].mxu0
      %v270 = vadd.f32 %v202, %v269
      %v271 = vpop.f32.mrb[0].mxu0
      %272 = vmatprep.mubr.bf16.mxu0 0
      %273 = vmatmul.mubr.bf16.gmra.mrb[0].mxu0 %v215
      %v274 = vpop.f32.mrb[0].mxu0
      %v275 = vadd.f32 %v202, %v274
      %v276 = vpop.f32.mrb[0].mxu0
      %v277 = vpop.f32.mrb[0].mxu0
      %v278 = vadd.f32 %v202, %v277
      %v279 = vpop.f32.mrb[0].mxu0
      %280 = vmatprep.mubr.bf16.mxu0 0
      %281 = vmatmul.mubr.bf16.gmra.mrb[0].mxu0 %v218
      %v282 = vpop.f32.mrb[0].mxu0
      %v283 = vadd.f32 %v202, %v282
      %v284 = vpop.f32.mrb[0].mxu0
      %v285 = vpop.f32.mrb[0].mxu0
      %v286 = vadd.f32 %v202, %v285
      %v287 = vpop.f32.mrb[0].mxu0
      %288 = vmatprep.mubr.bf16.mxu0 0
      %289 = vmatmul.mubr.bf16.gmra.mrb[0].mxu0 %v221
      %v290 = vpop.f32.mrb[0].mxu0
      %v291 = vadd.f32 %v202, %v290
      %v292 = vpop.f32.mrb[0].mxu0
      %v293 = vpop.f32.mrb[0].mxu0
      %v294 = vadd.f32 %v202, %v293
      %v295 = vpop.f32.mrb[0].mxu0
      %296 = vmatprep.mubr.bf16.mxu0 0
      %297 = vmatmul.mubr.bf16.gmra.mrb[0].mxu0 %v224
      %v298 = vpop.f32.mrb[0].mxu0
      %v299 = vadd.f32 %v202, %v298
      %v300 = vpop.f32.mrb[0].mxu0
      %v301 = vpop.f32.mrb[0].mxu0
      %v302 = vadd.f32 %v202, %v301
      %v303 = vpop.f32.mrb[0].mxu0
      %304 = vmatprep.mubr.bf16.mxu0 0
      %305 = vmatmul.mubr.bf16.gmra.mrb[0].mxu0 %v227
      %v306 = vpop.f32.mrb[0].mxu0
      %v307 = vadd.f32 %v202, %v306
      %v308 = vpop.f32.mrb[0].mxu0
      %v309 = vpop.f32.mrb[0].mxu0
      %v310 = vadd.f32 %v202, %v309
      %v311 = vpop.f32.mrb[0].mxu0
      %312 = vmatprep.mubr.bf16.mxu0 0
      %313 = vmatmul.mubr.bf16.gmra.mrb[0].mxu0 %v230
      %v314 = vpop.f32.mrb[0].mxu0
      %v315 = vadd.f32 %v202, %v314
      %v316 = vpop.f32.mrb[0].mxu0
      %v317 = vpop.f32.mrb[0].mxu0
      %v318 = vpop.f32.mrb[0].mxu0
      %319 = vdwg.mxu0
      %vm320 = vcmp.gt.f32.partialorder %v267, 0.0
      %vm321 = vcmp.gt.f32.partialorder %v270, 0.0
      %vm322 = vcmp.gt.f32.partialorder %v275, 0.0
      %vm323 = vcmp.gt.f32.partialorder %v278, 0.0
      %vm324 = vcmp.gt.f32.partialorder %v283, 0.0
      %vm325 = vcmp.gt.f32.partialorder %v286, 0.0
      %vm326 = vcmp.gt.f32.partialorder %v291, 0.0
      %vm327 = vcmp.gt.f32.partialorder %v294, 0.0
      %vm328 = vcmp.gt.f32.partialorder %v299, 0.0
      %vm329 = vcmp.gt.f32.partialorder %v302, 0.0
      %vm330 = vcmp.gt.f32.partialorder %v307, 0.0
      %vm331 = vcmp.gt.f32.partialorder %v310, 0.0
      %vm332 = vcmp.gt.f32.partialorder %v315, 0.0
      %v333 = vmul.f32 %v267, 0.01
      %v334 = vmul.f32 %v270, 0.01
      %v335 = vmul.f32 %v275, 0.01
      %v336 = vmul.f32 %v278, 0.01
      %v337 = vmul.f32 %v283, 0.01
      %v338 = vmul.f32 %v286, 0.01
      %v339 = vmul.f32 %v291, 0.01
      %v340 = vmul.f32 %v294, 0.01
      %v341 = vmul.f32 %v299, 0.01
      %v342 = vmul.f32 %v302, 0.01
      %v343 = vmul.f32 %v307, 0.01
      %v344 = vmul.f32 %v310, 0.01
      %v345 = vmul.f32 %v315, 0.01
      %v346 = vsel %vm320, %v267, %v333
      %v347 = vsel %vm321, %v270, %v334
      %v348 = vsel %vm322, %v275, %v335
      %v349 = vsel %vm323, %v278, %v336
      %v350 = vsel %vm324, %v283, %v337
      %v351 = vsel %vm325, %v286, %v338
      %v352 = vsel %vm326, %v291, %v339
      %v353 = vsel %vm327, %v294, %v340
      %v354 = vsel %vm328, %v299, %v341
      %v355 = vsel %vm329, %v302, %v342
      %v356 = vsel %vm330, %v307, %v343
      %v357 = vsel %vm331, %v310, %v344
      %v358 = vsel %vm332, %v315, %v345
      %v359 = vpack.c.bf16 %v347, %v346
      %v360 = vpack.c.bf16 %v349, %v348
      %v361 = vpack.c.bf16 %v351, %v350
      %v362 = vpack.c.bf16 %v353, %v352
      %v363 = vpack.c.bf16 %v355, %v354
      %v364 = vpack.c.bf16 %v357, %v356
      %v365 = vpack.c.bf16 %v358, %v358
      %s366 = scalar_lea.vmem %s1, 64
      %v367 = vld [vmem:[%s366] sm:$0xf]
      %v368 = vld [vmem:[%s366 + $0x4] sm:$0xf]
      %v369 = vld [vmem:[%s366 + $0x8] sm:$0xf]
      %v370 = vld [vmem:[%s366 + $0xc] sm:$0xf]
      %v371 = vld [vmem:[%s366 + $0x10] sm:$0xf]
      %v372 = vld [vmem:[%s366 + $0x14] sm:$0xf]
      %v373 = vld [vmem:[%s366 + $0x18] sm:$0xf]
      %v374 = vld [vmem:[%s366 + $0x1c] sm:$0xf]
      %v375 = vld [vmem:[%s366 + $0x20] sm:$0xf]
      %v376 = vld [vmem:[%s366 + $0x24] sm:$0xf]
      %v377 = vld [vmem:[%s366 + $0x28] sm:$0xf]
      %v378 = vld [vmem:[%s366 + $0x2c] sm:$0xf]
      %v379 = vld [vmem:[%s366 + $0x30] sm:$0xf]
      %v380 = vld [vmem:[%s366 + $0x34] sm:$0xf]
      %v381 = vld [vmem:[%s366 + $0x38] sm:$0xf]
      %v382 = vld [vmem:[%s366 + $0x3c] sm:$0xf]
      %s383 = scalar_lea.vmem %s2, 1
      %v384 = vld [vmem:[%s383] sm:$0x1]
      %v386 = vlaneseq
      %v387 = vshrl.u32 %v386, 7
      %v388 = vsub.s32 0, %v387
      %v389 = vrot.slane %v384, %v388
      %v407 = vunpack.c.l.b16 %v367
      %v408 = vunpack.c.l.b16 %v368
      %v409 = vunpack.c.l.b16 %v369
      %v410 = vunpack.c.l.b16 %v370
      %v411 = vunpack.c.l.b16 %v371
      %v412 = vunpack.c.l.b16 %v372
      %v413 = vunpack.c.l.b16 %v373
      %v414 = vunpack.c.l.b16 %v374
      %v415 = vunpack.c.l.b16 %v375
      %v416 = vunpack.c.l.b16 %v376
      %v417 = vunpack.c.l.b16 %v377
      %v418 = vunpack.c.l.b16 %v378
      %v419 = vunpack.c.l.b16 %v379
      %v420 = vunpack.c.l.b16 %v380
      %v421 = vunpack.c.l.b16 %v381
      %v422 = vunpack.c.l.b16 %v382
      %v423 = vpack.c.b16 %v408, %v407
      %v424 = vpack.c.b16 %v410, %v409
      %v425 = vpack.c.b16 %v412, %v411
      %v426 = vpack.c.b16 %v414, %v413
      %v427 = vpack.c.b16 %v416, %v415
      %v428 = vpack.c.b16 %v418, %v417
      %v429 = vpack.c.b16 %v420, %v419
      %v430 = vpack.c.b16 %v422, %v421
      %439 = vmatprep.subr.bf16.mxu0 0
      %440 = vmatpush1.bf16.msra.mxu0 %v423
      %441 = vmatprep.subr.bf16.mxu0 0
      %442 = vmatpush1.bf16.msra.mxu0 %v424
      %443 = vmatprep.subr.bf16.mxu0 0
      %444 = vmatpush1.bf16.msra.mxu0 %v425
      %445 = vmatprep.subr.bf16.mxu0 0
      %446 = vmatpush1.bf16.msra.mxu0 %v426
      %447 = vmatprep.subr.bf16.mxu0 0
      %448 = vmatpush1.bf16.msra.mxu0 %v427
      %449 = vmatprep.subr.bf16.mxu0 0
      %450 = vmatpush1.bf16.msra.mxu0 %v428
      %451 = vmatprep.subr.bf16.mxu0 0
      %452 = vmatpush1.bf16.msra.mxu0 %v429
      %453 = vmatprep.subr.bf16.mxu0 0
      %454 = vmatpush1.bf16.msra.mxu0 %v430
      %455 = vmatprep.subr.bf16.mxu0 0
      %456 = vmatpush1.bf16.msra.mxu0 0
      %457 = vmatprep.subr.bf16.mxu0 0
      %458 = vmatpush1.bf16.msra.mxu0 0
      %459 = vmatprep.subr.bf16.mxu0 0
      %460 = vmatpush1.bf16.msra.mxu0 0
      %461 = vmatprep.subr.bf16.mxu0 0
      %462 = vmatpush1.bf16.msra.mxu0 0
      %463 = vmatprep.subr.bf16.mxu0 0
      %464 = vmatpush1.bf16.msra.mxu0 0
      %465 = vmatprep.subr.bf16.mxu0 0
      %466 = vmatpush1.bf16.msra.mxu0 0
      %467 = vmatprep.subr.bf16.mxu0 0
      %468 = vmatpush1.bf16.msra.mxu0 0
      %469 = vmatprep.subr.bf16.mxu0 0
      %470 = vmatpush1.bf16.msra.mxu0 0
      %471 = vmatprep.mubr.bf16.mxu0 0
      %472 = vmatmul.mubr.bf16.gmra.mrb[0].mxu0 %v359
      %v473 = vpop.f32.mrb[0].mxu0
      %v474 = vadd.f32 %v389, %v473
      %v475 = vpop.f32.mrb[0].mxu0
      %v476 = vpop.f32.mrb[0].mxu0
      %v477 = vadd.f32 %v389, %v476
      %v478 = vpop.f32.mrb[0].mxu0
      %479 = vmatprep.mubr.bf16.mxu0 0
      %480 = vmatmul.mubr.bf16.gmra.mrb[0].mxu0 %v360
      %v481 = vpop.f32.mrb[0].mxu0
      %v482 = vadd.f32 %v389, %v481
      %v483 = vpop.f32.mrb[0].mxu0
      %v484 = vpop.f32.mrb[0].mxu0
      %v485 = vadd.f32 %v389, %v484
      %v486 = vpop.f32.mrb[0].mxu0
      %487 = vmatprep.mubr.bf16.mxu0 0
      %488 = vmatmul.mubr.bf16.gmra.mrb[0].mxu0 %v361
      %v489 = vpop.f32.mrb[0].mxu0
      %v490 = vadd.f32 %v389, %v489
      %v491 = vpop.f32.mrb[0].mxu0
      %v492 = vpop.f32.mrb[0].mxu0
      %v493 = vadd.f32 %v389, %v492
      %v494 = vpop.f32.mrb[0].mxu0
      %495 = vmatprep.mubr.bf16.mxu0 0
      %496 = vmatmul.mubr.bf16.gmra.mrb[0].mxu0 %v362
      %v497 = vpop.f32.mrb[0].mxu0
      %v498 = vadd.f32 %v389, %v497
      %v499 = vpop.f32.mrb[0].mxu0
      %v500 = vpop.f32.mrb[0].mxu0
      %v501 = vadd.f32 %v389, %v500
      %v502 = vpop.f32.mrb[0].mxu0
      %503 = vmatprep.mubr.bf16.mxu0 0
      %504 = vmatmul.mubr.bf16.gmra.mrb[0].mxu0 %v363
      %v505 = vpop.f32.mrb[0].mxu0
      %v506 = vadd.f32 %v389, %v505
      %v507 = vpop.f32.mrb[0].mxu0
      %v508 = vpop.f32.mrb[0].mxu0
      %v509 = vadd.f32 %v389, %v508
      %v510 = vpop.f32.mrb[0].mxu0
      %511 = vmatprep.mubr.bf16.mxu0 0
      %512 = vmatmul.mubr.bf16.gmra.mrb[0].mxu0 %v364
      %v513 = vpop.f32.mrb[0].mxu0
      %v514 = vadd.f32 %v389, %v513
      %v515 = vpop.f32.mrb[0].mxu0
      %v516 = vpop.f32.mrb[0].mxu0
      %v517 = vadd.f32 %v389, %v516
      %v518 = vpop.f32.mrb[0].mxu0
      %519 = vmatprep.mubr.bf16.mxu0 0
      %520 = vmatmul.mubr.bf16.gmra.mrb[0].mxu0 %v365
      %v521 = vpop.f32.mrb[0].mxu0
      %v522 = vadd.f32 %v389, %v521
      %v523 = vpop.f32.mrb[0].mxu0
      %v524 = vpop.f32.mrb[0].mxu0
      %v525 = vpop.f32.mrb[0].mxu0
      %526 = vdwg.mxu0
      %vm527 = vcmp.gt.f32.partialorder %v474, 0.0
      %vm528 = vcmp.gt.f32.partialorder %v477, 0.0
      %vm529 = vcmp.gt.f32.partialorder %v482, 0.0
      %vm530 = vcmp.gt.f32.partialorder %v485, 0.0
      %vm531 = vcmp.gt.f32.partialorder %v490, 0.0
      %vm532 = vcmp.gt.f32.partialorder %v493, 0.0
      %vm533 = vcmp.gt.f32.partialorder %v498, 0.0
      %vm534 = vcmp.gt.f32.partialorder %v501, 0.0
      %vm535 = vcmp.gt.f32.partialorder %v506, 0.0
      %vm536 = vcmp.gt.f32.partialorder %v509, 0.0
      %vm537 = vcmp.gt.f32.partialorder %v514, 0.0
      %vm538 = vcmp.gt.f32.partialorder %v517, 0.0
      %vm539 = vcmp.gt.f32.partialorder %v522, 0.0
      %v540 = vmul.f32 %v474, 0.01
      %v541 = vmul.f32 %v477, 0.01
      %v542 = vmul.f32 %v482, 0.01
      %v543 = vmul.f32 %v485, 0.01
      %v544 = vmul.f32 %v490, 0.01
      %v545 = vmul.f32 %v493, 0.01
      %v546 = vmul.f32 %v498, 0.01
      %v547 = vmul.f32 %v501, 0.01
      %v548 = vmul.f32 %v506, 0.01
      %v549 = vmul.f32 %v509, 0.01
      %v550 = vmul.f32 %v514, 0.01
      %v551 = vmul.f32 %v517, 0.01
      %v552 = vmul.f32 %v522, 0.01
      %v553 = vsel %vm527, %v474, %v540
      %v554 = vsel %vm528, %v477, %v541
      %v555 = vsel %vm529, %v482, %v542
      %v556 = vsel %vm530, %v485, %v543
      %v557 = vsel %vm531, %v490, %v544
      %v558 = vsel %vm532, %v493, %v545
      %v559 = vsel %vm533, %v498, %v546
      %v560 = vsel %vm534, %v501, %v547
      %v561 = vsel %vm535, %v506, %v548
      %v562 = vsel %vm536, %v509, %v549
      %v563 = vsel %vm537, %v514, %v550
      %v564 = vsel %vm538, %v517, %v551
      %v565 = vsel %vm539, %v522, %v552
      %v566 = vpack.c.bf16 %v554, %v553
      %v567 = vpack.c.bf16 %v556, %v555
      %v568 = vpack.c.bf16 %v558, %v557
      %v569 = vpack.c.bf16 %v560, %v559
      %v570 = vpack.c.bf16 %v562, %v561
      %v571 = vpack.c.bf16 %v564, %v563
      %v572 = vpack.c.bf16 %v565, %v565
      %s573 = scalar_lea.vmem %s1, 128
      %v574 = vld [vmem:[%s573] sm:$0xf]
      %v575 = vld [vmem:[%s573 + $0x4] sm:$0xf]
      %v576 = vld [vmem:[%s573 + $0x8] sm:$0xf]
      %v577 = vld [vmem:[%s573 + $0xc] sm:$0xf]
      %v578 = vld [vmem:[%s573 + $0x10] sm:$0xf]
      %v579 = vld [vmem:[%s573 + $0x14] sm:$0xf]
      %v580 = vld [vmem:[%s573 + $0x18] sm:$0xf]
      %v581 = vld [vmem:[%s573 + $0x1c] sm:$0xf]
      %v582 = vld [vmem:[%s573 + $0x20] sm:$0xf]
      %v583 = vld [vmem:[%s573 + $0x24] sm:$0xf]
      %v584 = vld [vmem:[%s573 + $0x28] sm:$0xf]
      %v585 = vld [vmem:[%s573 + $0x2c] sm:$0xf]
      %v586 = vld [vmem:[%s573 + $0x30] sm:$0xf]
      %v587 = vld [vmem:[%s573 + $0x34] sm:$0xf]
      %v588 = vld [vmem:[%s573 + $0x38] sm:$0xf]
      %v589 = vld [vmem:[%s573 + $0x3c] sm:$0xf]
      %s590 = scalar_lea.vmem %s2, 2
      %v591 = vld [vmem:[%s590] sm:$0x1]
      %v593 = vlaneseq
      %v594 = vshrl.u32 %v593, 7
      %v595 = vsub.s32 0, %v594
      %v596 = vrot.slane %v591, %v595
      %v614 = vunpack.c.l.b16 %v574
      %v615 = vunpack.c.l.b16 %v575
      %v616 = vunpack.c.l.b16 %v576
      %v617 = vunpack.c.l.b16 %v577
      %v618 = vunpack.c.l.b16 %v578
      %v619 = vunpack.c.l.b16 %v579
      %v620 = vunpack.c.l.b16 %v580
      %v621 = vunpack.c.l.b16 %v581
      %v622 = vunpack.c.l.b16 %v582
      %v623 = vunpack.c.l.b16 %v583
      %v624 = vunpack.c.l.b16 %v584
      %v625 = vunpack.c.l.b16 %v585
      %v626 = vunpack.c.l.b16 %v586
      %v627 = vunpack.c.l.b16 %v587
      %v628 = vunpack.c.l.b16 %v588
      %v629 = vunpack.c.l.b16 %v589
      %v630 = vpack.c.b16 %v615, %v614
      %v631 = vpack.c.b16 %v617, %v616
      %v632 = vpack.c.b16 %v619, %v618
      %v633 = vpack.c.b16 %v621, %v620
      %v634 = vpack.c.b16 %v623, %v622
      %v635 = vpack.c.b16 %v625, %v624
      %v636 = vpack.c.b16 %v627, %v626
      %v637 = vpack.c.b16 %v629, %v628
      %646 = vmatprep.subr.bf16.mxu0 0
      %647 = vmatpush1.bf16.msra.mxu0 %v630
      %648 = vmatprep.subr.bf16.mxu0 0
      %649 = vmatpush1.bf16.msra.mxu0 %v631
      %650 = vmatprep.subr.bf16.mxu0 0
      %651 = vmatpush1.bf16.msra.mxu0 %v632
      %652 = vmatprep.subr.bf16.mxu0 0
      %653 = vmatpush1.bf16.msra.mxu0 %v633
      %654 = vmatprep.subr.bf16.mxu0 0
      %655 = vmatpush1.bf16.msra.mxu0 %v634
      %656 = vmatprep.subr.bf16.mxu0 0
      %657 = vmatpush1.bf16.msra.mxu0 %v635
      %658 = vmatprep.subr.bf16.mxu0 0
      %659 = vmatpush1.bf16.msra.mxu0 %v636
      %660 = vmatprep.subr.bf16.mxu0 0
      %661 = vmatpush1.bf16.msra.mxu0 %v637
      %662 = vmatprep.subr.bf16.mxu0 0
      %663 = vmatpush1.bf16.msra.mxu0 0
      %664 = vmatprep.subr.bf16.mxu0 0
      %665 = vmatpush1.bf16.msra.mxu0 0
      %666 = vmatprep.subr.bf16.mxu0 0
      %667 = vmatpush1.bf16.msra.mxu0 0
      %668 = vmatprep.subr.bf16.mxu0 0
      %669 = vmatpush1.bf16.msra.mxu0 0
      %670 = vmatprep.subr.bf16.mxu0 0
      %671 = vmatpush1.bf16.msra.mxu0 0
      %672 = vmatprep.subr.bf16.mxu0 0
      %673 = vmatpush1.bf16.msra.mxu0 0
      %674 = vmatprep.subr.bf16.mxu0 0
      %675 = vmatpush1.bf16.msra.mxu0 0
      %676 = vmatprep.subr.bf16.mxu0 0
      %677 = vmatpush1.bf16.msra.mxu0 0
      %678 = vmatprep.mubr.bf16.mxu0 0
      %679 = vmatmul.mubr.bf16.gmra.mrb[0].mxu0 %v566
      %v680 = vpop.f32.mrb[0].mxu0
      %v681 = vadd.f32 %v596, %v680
      %v682 = vpop.f32.mrb[0].mxu0
      %v683 = vpop.f32.mrb[0].mxu0
      %v684 = vadd.f32 %v596, %v683
      %v685 = vpop.f32.mrb[0].mxu0
      %686 = vmatprep.mubr.bf16.mxu0 0
      %687 = vmatmul.mubr.bf16.gmra.mrb[0].mxu0 %v567
      %v688 = vpop.f32.mrb[0].mxu0
      %v689 = vadd.f32 %v596, %v688
      %v690 = vpop.f32.mrb[0].mxu0
      %v691 = vpop.f32.mrb[0].mxu0
      %v692 = vadd.f32 %v596, %v691
      %v693 = vpop.f32.mrb[0].mxu0
      %694 = vmatprep.mubr.bf16.mxu0 0
      %695 = vmatmul.mubr.bf16.gmra.mrb[0].mxu0 %v568
      %v696 = vpop.f32.mrb[0].mxu0
      %v697 = vadd.f32 %v596, %v696
      %v698 = vpop.f32.mrb[0].mxu0
      %v699 = vpop.f32.mrb[0].mxu0
      %v700 = vadd.f32 %v596, %v699
      %v701 = vpop.f32.mrb[0].mxu0
      %702 = vmatprep.mubr.bf16.mxu0 0
      %703 = vmatmul.mubr.bf16.gmra.mrb[0].mxu0 %v569
      %v704 = vpop.f32.mrb[0].mxu0
      %v705 = vadd.f32 %v596, %v704
      %v706 = vpop.f32.mrb[0].mxu0
      %v707 = vpop.f32.mrb[0].mxu0
      %v708 = vadd.f32 %v596, %v707
      %v709 = vpop.f32.mrb[0].mxu0
      %710 = vmatprep.mubr.bf16.mxu0 0
      %711 = vmatmul.mubr.bf16.gmra.mrb[0].mxu0 %v570
      %v712 = vpop.f32.mrb[0].mxu0
      %v713 = vadd.f32 %v596, %v712
      %v714 = vpop.f32.mrb[0].mxu0
      %v715 = vpop.f32.mrb[0].mxu0
      %v716 = vadd.f32 %v596, %v715
      %v717 = vpop.f32.mrb[0].mxu0
      %718 = vmatprep.mubr.bf16.mxu0 0
      %719 = vmatmul.mubr.bf16.gmra.mrb[0].mxu0 %v571
      %v720 = vpop.f32.mrb[0].mxu0
      %v721 = vadd.f32 %v596, %v720
      %v722 = vpop.f32.mrb[0].mxu0
      %v723 = vpop.f32.mrb[0].mxu0
      %v724 = vadd.f32 %v596, %v723
      %v725 = vpop.f32.mrb[0].mxu0
      %726 = vmatprep.mubr.bf16.mxu0 0
      %727 = vmatmul.mubr.bf16.gmra.mrb[0].mxu0 %v572
      %v728 = vpop.f32.mrb[0].mxu0
      %v729 = vadd.f32 %v596, %v728
      %v730 = vpop.f32.mrb[0].mxu0
      %v731 = vpop.f32.mrb[0].mxu0
      %v732 = vpop.f32.mrb[0].mxu0
      %733 = vdwg.mxu0
      %734 = vst.msk [vmem:[%s172] sm:$0xff] %vm210, %v681
      %735 = vst.msk [vmem:[%s172 + $0x8] sm:$0xff] %vm210, %v684
      %736 = vst.msk [vmem:[%s172 + $0x10] sm:$0xff] %vm210, %v689
      %737 = vst.msk [vmem:[%s172 + $0x18] sm:$0xff] %vm210, %v692
      %738 = vst.msk [vmem:[%s172 + $0x20] sm:$0xff] %vm210, %v697
      %739 = vst.msk [vmem:[%s172 + $0x28] sm:$0xff] %vm210, %v700
      %740 = vst.msk [vmem:[%s172 + $0x30] sm:$0xff] %vm210, %v705
      %741 = vst.msk [vmem:[%s172 + $0x38] sm:$0xff] %vm210, %v708
      %742 = vst.msk [vmem:[%s172 + $0x40] sm:$0xff] %vm210, %v713
      %743 = vst.msk [vmem:[%s172 + $0x48] sm:$0xff] %vm210, %v716
      %744 = vst.msk [vmem:[%s172 + $0x50] sm:$0xff] %vm210, %v721
      %745 = vst.msk [vmem:[%s172 + $0x58] sm:$0xff] %vm210, %v724
      %746 = vst.msk [vmem:[%s172 + $0x60] sm:$0xff] %vm210, %v729
      %s747 = smul.u32 13, %s14
      %p748 = scmp.lt.s32.totalorder %s747, 25
      %s749 = scalar_select %p748, %s747, 25
      %s750 = smul.addr %s749, 8
      %s751 = scalar_lea.vmem %s3, %s750
      // Predicated region
      $region33: #{successor_representation.1} parent=31 // pred_check
        %p752 = pneg %p100
      $region34: #{successor_representation.1} parent=31 // pred_check_branch
        %754 = sbr.rel (%p752) target = $region36
      $region35: #{successor_representation.1} parent=31 // pred_region
        %s755 = smul.u32 13, %s14
      $region36: #{successor_representation.1} parent=31 // pred_fallthru
        _
    $region32: #{successor_representation.1} parent=5 // pred_fallthru
      _
    %p756 = scmp.le.s32.totalorder 2, %s9
    // Predicated region
    $region37: #{successor_representation.1} parent=5 // pred_check
      %p757 = pneg %p756
    $region38: #{successor_representation.1} parent=5 // pred_check_branch
      %759 = sbr.rel (%p757) target = $region40
    $region39: #{successor_representation.1} parent=5 // pred_region
      %s760 = ssub.s32 %s9, 2
      // Predicated region
      $region41: #{successor_representation.1} parent=39 // pred_check
        %p761 = pneg %p106
      $region42: #{successor_representation.1} parent=39 // pred_check_branch
        %763 = sbr.rel (%p761) target = $region44
      $region43: #{successor_representation.1} parent=39 // pred_region
        %s764 = smul.u32 13, %s15
        %p765 = scmp.lt.s32.totalorder %s764, 25
        %s766 = scalar_select %p765, %s764, 25
        %s767 = smul.addr %s766, 8
        %s768 = scalar_lea.vmem %s3, %s767
      $region44: #{successor_representation.1} parent=39 // pred_fallthru
        _
    $region40: #{successor_representation.1} parent=5 // pred_fallthru
      _
  $region6: #{successor_representation.1} parent=0 // loop_footer
    %s13 = sadd.s32 1, %s9
  $region7: #{successor_representation.1} parent=0 // loop_footer_branch
    %8 = sbr.rel target = $region3
  $region8: #{successor_representation.1} parent=0 // loop_exit
    _

</llo_original>
